<compile_context>
chip_gen: v6e
topology: v6e:2x2x1
jax: 0.10.0
libtpu: 0.0.40
codegen_flags: <defaults>
</compile_context>

<pallas_src>
import functools

import jax
import jax.numpy as jnp
from jax import lax
from jax.experimental import pallas as pl
from jax.experimental.pallas import tpu as pltpu


def _round_up(v, m):
    return (v + m - 1) // m * m


def _vmem_limit_bytes():
    """Generation-aware VMEM budget: leave headroom below physical capacity
    (64 MiB/TC on v7x, 128 MiB on v5e/v6e) for compiler-internal scratch."""
    try:
        phys = pltpu.get_tpu_info().vmem_capacity_bytes
    except Exception:
        phys = 64 * 1024 * 1024
    return int(max(32 << 20, min(phys - (16 << 20), 110 << 20)))


# ---------------- Pass 1: row-tiled projections (qx, kx, support+ones) ----------------
def _proj_kernel(x_ref, wqT_ref, bq_ref, wkT_ref, bk_ref, wgc_ref,
                 qx_ref, kx_ref, sup_ref, *, n_valid, n_total, n_hid_p):
    x = x_ref[...]                                                    # (T, Fp)
    tile = x.shape[0]

    qx_ref[...] = jnp.dot(x, wqT_ref[...], preferred_element_type=jnp.float32) + bq_ref[...]
    kx = jnp.dot(x, wkT_ref[...], preferred_element_type=jnp.float32) + bk_ref[...]

    # Support in the first Hp lanes plus a "ones" column at lane Hp: pass 2 then
    # obtains the L1 denominator from the same MXU matmul as adj@support (no
    # per-step cross-lane reduction, no lane-width-1 scratch).
    sup_ref[:, :n_hid_p] = jnp.dot(x, wgc_ref[...], preferred_element_type=jnp.float32)
    lane = lax.broadcasted_iota(jnp.int32, (tile, 128), 1)
    sup_ref[:, n_hid_p:] = (lane == 0).astype(jnp.float32)

    # Zero padded kv rows of kx so the Linear bias does not leak into the L1
    # denominator / numerator of real rows. Only tiles that actually contain
    # padded rows pay for the iota + select.
    if n_total == n_valid:
        kx_ref[...] = kx
    else:
        i = pl.program_id(0)
        first_pad_tile = n_valid // tile        # static: first tile touching padding

        @pl.when(i < first_pad_tile)
        def _store_full():
            kx_ref[...] = kx

        @pl.when(i >= first_pad_tile)
        def _store_masked():
            row = i * tile + lax.broadcasted_iota(jnp.int32, kx.shape, 0)
            kx_ref[...] = jnp.where(row < n_valid, kx, 0.0)


# -------- Pass 2: fused adjacency construction + normalization + graph conv -------
def _gcn_fused_kernel(qx_ref, kx_ref, sup_ref, bgc_ref, out_ref, acc_ref, *, n_hid_p):
    j = pl.program_id(1)

    @pl.when(j == 0)
    def _init():
        acc_ref[...] = jnp.zeros_like(acc_ref)

    # s_ij = qx_i @ kx_j^T without an explicit transpose (contract feature axes).
    s = lax.dot_general(qx_ref[...], kx_ref[...],
                        (((1,), (1,)), ((), ())),
                        preferred_element_type=jnp.float32)           # (Tq, Tk)
    sq = s * s
    # Single MXU matmul: numerator (first Hp lanes) + L1 denominator (ones column).
    acc_ref[...] += jnp.dot(sq, sup_ref[...], preferred_element_type=jnp.float32)

    @pl.when(j == pl.num_programs(1) - 1)
    def _finalize():
        acc = acc_ref[...]
        num = acc[:, :n_hid_p]
        den = acc[:, n_hid_p:n_hid_p + 1]
        inv = pl.reciprocal(jnp.maximum(den, 1e-12), approx=False)
        out_ref[...] = jnp.maximum(num * inv + bgc_ref[...], 0.0)


def _pass2_vmem_bytes(tq, tk, fp, hp, hpa):
    dbl = 2  # BlockSpec double-buffering of input/output blocks
    blocks = dbl * (tq * fp + tk * fp + tk * hpa + tq * hp + hp)
    scratch = tq * hpa           # f32 accumulator
    inter = tq * tk              # s / sq intermediate
    return 4 * (blocks + scratch + inter)


def gcn_forward(x, params, *, q_tile=512, kv_tile=256):
    """x: (N, nfeat) float32. params: dict of weights (see init_params)."""
    N, F = x.shape
    H = params["w_gc"].shape[1]

    Fp = _round_up(F, 128)
    Hp = _round_up(H, 128)
    Hpa = Hp + 128                                  # support + ones (denominator) block

    vmem_cap = _vmem_limit_bytes()

    # kv (reduction) tile: MXU-matched 256 by default, capped at padded N.
    Tk = min(_round_up(kv_tile, 128), _round_up(N, 128))
    # q tile: decoupled from the kv tile, as large as the VMEM budget allows
    # (pass-2 kx/support HBM re-reads scale with Np/Tq), kept a multiple of Tk.
    Tq = max(Tk, _round_up(q_tile, Tk))
    Tq = min(Tq, _round_up(N, Tk))
    budget = (vmem_cap * 3) // 5
    while Tq > Tk and _pass2_vmem_bytes(Tq, Tk, Fp, Hp, Hpa) > budget:
        Tq -= Tk
    Np = _round_up(N, Tq)
    # v7x megacore: best-effort even q-tile count so the "parallel" axis shards
    # evenly across the two TensorCores (keeps Tq a multiple of Tk).
    if (Np // Tq) % 2 == 1 and Tq % (2 * Tk) == 0:
        Tq //= 2
        Np = _round_up(N, Tq)
    T1 = Tk                                         # pass-1 row tile; Np % Tk == 0

    pad2 = lambda a, r, c: jnp.pad(a, ((0, r - a.shape[0]), (0, c - a.shape[1])))

    x_p = pad2(x.astype(jnp.float32), Np, Fp)
    wqT = pad2(params["wq"].T, Fp, Fp)              # PyTorch Linear stores (out,in) -> (in,out)
    wkT = pad2(params["wk"].T, Fp, Fp)
    bq = pad2(params["bq"].reshape(1, F), 1, Fp)
    bk = pad2(params["bk"].reshape(1, F), 1, Fp)
    wgc = pad2(params["w_gc"], Fp, Hp)
    bgc = pad2(params["b_gc"].reshape(1, H), 1, Hp)

    # ---- Pass 1: qx / kx / support(+ones), row tiled, weights resident ----
    # TODO(synk): for very large feature dims (Fp >~ 1024 on v7x) tile the weight
    # output columns with an extra grid axis (or store weights in bf16) so the
    # resident double-buffered wqT/wkT/wgc blocks stay within 64 MiB per TC.
    qx, kx, sup = pl.pallas_call(
        functools.partial(_proj_kernel, n_valid=N, n_total=Np, n_hid_p=Hp),
        out_shape=(
            jax.ShapeDtypeStruct((Np, Fp), jnp.float32),
            jax.ShapeDtypeStruct((Np, Fp), jnp.float32),
            jax.ShapeDtypeStruct((Np, Hpa), jnp.float32),
        ),
        grid=(Np // T1,),
        in_specs=[
            pl.BlockSpec((T1, Fp), lambda i: (i, 0)),    # x row tile
            pl.BlockSpec((Fp, Fp), lambda i: (0, 0)),    # Wq^T (resident)
            pl.BlockSpec((1, Fp), lambda i: (0, 0)),     # bq
            pl.BlockSpec((Fp, Fp), lambda i: (0, 0)),    # Wk^T (resident)
            pl.BlockSpec((1, Fp), lambda i: (0, 0)),     # bk
            pl.BlockSpec((Fp, Hp), lambda i: (0, 0)),    # W_gc (resident)
        ],
        out_specs=(
            pl.BlockSpec((T1, Fp), lambda i: (i, 0)),
            pl.BlockSpec((T1, Fp), lambda i: (i, 0)),
            pl.BlockSpec((T1, Hpa), lambda i: (i, 0)),
        ),
        compiler_params=pltpu.CompilerParams(
            dimension_semantics=("parallel",),
            vmem_limit_bytes=vmem_cap,
        ),
    )(x_p, wqT, bq, wkT, bk, wgc)

    # ---- Pass 2: flash-style fused adjacency + normalization + graph conv ----
    out_p = pl.pallas_call(
        functools.partial(_gcn_fused_kernel, n_hid_p=Hp),
        out_shape=jax.ShapeDtypeStruct((Np, Hp), jnp.float32),
        grid=(Np // Tq, Np // Tk),                       # (q tiles, kv tiles) - reduction last
        in_specs=[
            pl.BlockSpec((Tq, Fp), lambda i, j: (i, 0)),     # qx  (q tile)
            pl.BlockSpec((Tk, Fp), lambda i, j: (j, 0)),     # kx  (kv tile, streamed)
            pl.BlockSpec((Tk, Hpa), lambda i, j: (j, 0)),    # support+ones (kv tile, streamed)
            pl.BlockSpec((1, Hp), lambda i, j: (0, 0)),      # b_gc
        ],
        out_specs=pl.BlockSpec((Tq, Hp), lambda i, j: (i, 0)),   # resident across kv axis
        scratch_shapes=[
            pltpu.VMEM((Tq, Hpa), jnp.float32),   # acc = [sum_j sq_ij @ sup_j | L1 denom]
        ],
        compiler_params=pltpu.CompilerParams(
            dimension_semantics=("parallel", "arbitrary"),
            vmem_limit_bytes=vmem_cap,
        ),
    )(qx, kx, sup, bgc)

    return out_p[:N, :H]


def init_params(key, nfeat, nhid):
    """Deterministic synthetic init mimicking the module's shapes.
    Linear layers: weight (out, in), bias (out,). GraphConvolution: xavier-normal
    (gain=0.02) weight (in, out), zero bias."""
    k1, k2, k3, k4, k5 = jax.random.split(key, 5)
    lin_bound = 1.0 / jnp.sqrt(jnp.float32(nfeat))
    return {
        "wq": jax.random.uniform(k1, (nfeat, nfeat), jnp.float32, -lin_bound, lin_bound),
        "bq": jax.random.uniform(k2, (nfeat,), jnp.float32, -lin_bound, lin_bound),
        "wk": jax.random.uniform(k3, (nfeat, nfeat), jnp.float32, -lin_bound, lin_bound),
        "bk": jax.random.uniform(k4, (nfeat,), jnp.float32, -lin_bound, lin_bound),
        # xavier_normal_ with gain=0.02: std = 0.02 * sqrt(2 / (fan_in + fan_out))
        "w_gc": 0.02 * jnp.sqrt(2.0 / (nfeat + nhid))
                * jax.random.normal(k5, (nfeat, nhid), jnp.float32),
        "b_gc": jnp.zeros((nhid,), jnp.float32),
    }


def gcn_reference(x, params):
    """Pure-JAX reference (full-precision matmuls) for correctness check."""
    dot = functools.partial(jnp.dot, precision=lax.Precision.HIGHEST)
    qx = dot(x, params["wq"].T) + params["bq"]
    kx = dot(x, params["wk"].T) + params["bk"]
    d = dot(qx, kx.T)
    sq = d ** 2
    adj = sq / jnp.maximum(jnp.sum(jnp.abs(sq), axis=-1, keepdims=True), 1e-12)
    out = dot(adj, dot(x, params["w_gc"])) + params["b_gc"]
    return jnp.maximum(out, 0.0)


if __name__ == "__main__":
    key = jax.random.PRNGKey(0)

    # Case 1: tiny module-consistent shapes (single tile after lane padding).
    N, NFEAT, NHID = 8, 16, 32
    kx_in, kp = jax.random.split(key)
    x = jax.random.normal(kx_in, (N, NFEAT), jnp.float32)
    params = init_params(kp, NFEAT, NHID)

    out = gcn_forward(x, params)
    jax.block_until_ready(out)
    ref = gcn_reference(x, params)
    assert out.shape == (N, NHID)
    assert jnp.allclose(out, ref, atol=1e-4, rtol=1e-4), "mismatch vs reference (small)"

    # Case 2: exercises the decoupled (Tq != Tk) multi-tile grid, the kv-axis
    # accumulator, and masking of padded kv rows spanning several row tiles.
    N2, F2, H2 = 300, 48, 96
    k1, k2 = jax.random.split(kp)
    x2 = jax.random.normal(k1, (N2, F2), jnp.float32)
    params2 = init_params(k2, F2, H2)

    out2 = gcn_forward(x2, params2, q_tile=256, kv_tile=128)
    jax.block_until_ready(out2)
    ref2 = gcn_reference(x2, params2)
    assert out2.shape == (N2, H2)
    assert jnp.allclose(out2, ref2, atol=1e-4, rtol=1e-4), "mismatch vs reference (tiled)"

    print("KERNEL_OK")
</pallas_src>

<mosaic_0001>
module attributes {stable_mosaic.version = 11 : i64} {
  func.func @_proj_kernel(%arg0: i32, %arg1: memref<128x128xf32, #tpu.memory_space<vmem>>, %arg2: memref<128x128xf32, #tpu.memory_space<vmem>>, %arg3: memref<1x128xf32, #tpu.memory_space<vmem>>, %arg4: memref<128x128xf32, #tpu.memory_space<vmem>>, %arg5: memref<1x128xf32, #tpu.memory_space<vmem>>, %arg6: memref<128x128xf32, #tpu.memory_space<vmem>>, %arg7: memref<128x128xf32, #tpu.memory_space<vmem>>, %arg8: memref<128x128xf32, #tpu.memory_space<vmem>>, %arg9: memref<128x256xf32, #tpu.memory_space<vmem>>) attributes {dimension_semantics = [#tpu.dimension_semantics<parallel>], iteration_bounds = array<i64: 1>, scalar_prefetch = 0 : i64, scratch_operands = 0 : i64, tpu.core_type = #tpu.core_type<tc>, window_params = [{transform_indices = @transform_0, window_bounds = array<i64: 128, 128>}, {pipeline_mode = #tpu.pipeline_mode<synchronous>, transform_indices = @transform_1, window_bounds = array<i64: 128, 128>}, {pipeline_mode = #tpu.pipeline_mode<synchronous>, transform_indices = @transform_2, window_bounds = array<i64: 1, 128>}, {pipeline_mode = #tpu.pipeline_mode<synchronous>, transform_indices = @transform_3, window_bounds = array<i64: 128, 128>}, {pipeline_mode = #tpu.pipeline_mode<synchronous>, transform_indices = @transform_4, window_bounds = array<i64: 1, 128>}, {pipeline_mode = #tpu.pipeline_mode<synchronous>, transform_indices = @transform_5, window_bounds = array<i64: 128, 128>}, {transform_indices = @transform_6, window_bounds = array<i64: 128, 128>}, {transform_indices = @transform_7, window_bounds = array<i64: 128, 128>}, {transform_indices = @transform_8, window_bounds = array<i64: 128, 256>}]} {
    %c0 = arith.constant 0 : index
    %c0_0 = arith.constant 0 : index
    %0 = vector.load %arg1[%c0, %c0_0] : memref<128x128xf32, #tpu.memory_space<vmem>>, vector<128x128xf32>
    %c0_1 = arith.constant 0 : index
    %c0_2 = arith.constant 0 : index
    %1 = vector.load %arg2[%c0_1, %c0_2] : memref<128x128xf32, #tpu.memory_space<vmem>>, vector<128x128xf32>
    %cst = arith.constant dense<0.000000e+00> : vector<128x128xf32>
    %2 = tpu.matmul %0, %1, %cst {dimension_numbers = #tpu.dot_dimension_numbers<[1], [0], [0], [1], [0, 0, 1, 1], [], []>} : vector<128x128xf32>, vector<128x128xf32>, vector<128x128xf32> -> vector<128x128xf32>
    %c0_3 = arith.constant 0 : index
    %c0_4 = arith.constant 0 : index
    %3 = vector.load %arg3[%c0_3, %c0_4] : memref<1x128xf32, #tpu.memory_space<vmem>>, vector<1x128xf32>
    %4 = vector.broadcast %3 : vector<1x128xf32> to vector<128x128xf32>
    %5 = arith.addf %2, %4 : vector<128x128xf32>
    %c0_5 = arith.constant 0 : index
    %c0_6 = arith.constant 0 : index
    %6 = vector.load %arg7[%c0_5, %c0_6] : memref<128x128xf32, #tpu.memory_space<vmem>>, vector<128x128xf32>
    tpu.vector_store %arg7[%c0_5, %c0_6], %5 {strides = array<i32>} : memref<128x128xf32, #tpu.memory_space<vmem>>, vector<128x128xf32>,
    %c0_7 = arith.constant 0 : index
    %c0_8 = arith.constant 0 : index
    %7 = vector.load %arg4[%c0_7, %c0_8] : memref<128x128xf32, #tpu.memory_space<vmem>>, vector<128x128xf32>
    %cst_9 = arith.constant dense<0.000000e+00> : vector<128x128xf32>
    %8 = tpu.matmul %0, %7, %cst_9 {dimension_numbers = #tpu.dot_dimension_numbers<[1], [0], [0], [1], [0, 0, 1, 1], [], []>} : vector<128x128xf32>, vector<128x128xf32>, vector<128x128xf32> -> vector<128x128xf32>
    %c0_10 = arith.constant 0 : index
    %c0_11 = arith.constant 0 : index
    %9 = vector.load %arg5[%c0_10, %c0_11] : memref<1x128xf32, #tpu.memory_space<vmem>>, vector<1x128xf32>
    %10 = vector.broadcast %9 : vector<1x128xf32> to vector<128x128xf32>
    %11 = arith.addf %8, %10 : vector<128x128xf32>
    %c0_12 = arith.constant 0 : index
    %c0_13 = arith.constant 0 : index
    %12 = vector.load %arg6[%c0_12, %c0_13] : memref<128x128xf32, #tpu.memory_space<vmem>>, vector<128x128xf32>
    %cst_14 = arith.constant dense<0.000000e+00> : vector<128x128xf32>
    %13 = tpu.matmul %0, %12, %cst_14 {dimension_numbers = #tpu.dot_dimension_numbers<[1], [0], [0], [1], [0, 0, 1, 1], [], []>} : vector<128x128xf32>, vector<128x128xf32>, vector<128x128xf32> -> vector<128x128xf32>
    %c0_15 = arith.constant 0 : index
    %c0_16 = arith.constant 0 : index
    %14 = vector.load %arg9[%c0_15, %c0_16] : memref<128x256xf32, #tpu.memory_space<vmem>>, vector<128x128xf32>
    tpu.vector_store %arg9[%c0_15, %c0_16], %13 {strides = array<i32>} : memref<128x256xf32, #tpu.memory_space<vmem>>, vector<128x128xf32>,
    %15 = tpu.iota {dimensions = array<i32: 1>} : vector<128x128xi32>
    %c0_i32 = arith.constant 0 : i32
    %16 = vector.broadcast %c0_i32 : i32 to vector<128x128xi32>
    %17 = arith.cmpi eq, %15, %16 : vector<128x128xi32>
    %18 = arith.extui %17 : vector<128x128xi1> to vector<128x128xi32>
    %19 = arith.sitofp %18 : vector<128x128xi32> to vector<128x128xf32>
    %c0_17 = arith.constant 0 : index
    %c128 = arith.constant 128 : index
    %20 = vector.load %arg9[%c0_17, %c128] : memref<128x256xf32, #tpu.memory_space<vmem>>, vector<128x128xf32>
    tpu.vector_store %arg9[%c0_17, %c128], %19 {strides = array<i32>} : memref<128x256xf32, #tpu.memory_space<vmem>>, vector<128x128xf32>,
    %c0_i32_18 = arith.constant 0 : i32
    %21 = arith.cmpi slt, %arg0, %c0_i32_18 : i32
    %22 = arith.extui %21 : i1 to i32
    %c0_i32_19 = arith.constant 0 : i32
    %23 = arith.cmpi ne, %22, %c0_i32_19 : i32
    scf.if %23 {
      %c0_22 = arith.constant 0 : index
      %c0_23 = arith.constant 0 : index
      %27 = vector.load %arg8[%c0_22, %c0_23] : memref<128x128xf32, #tpu.memory_space<vmem>>, vector<128x128xf32>
      tpu.vector_store %arg8[%c0_22, %c0_23], %11 {strides = array<i32>} : memref<128x128xf32, #tpu.memory_space<vmem>>, vector<128x128xf32>,
    } else {
    }
    %c0_i32_20 = arith.constant 0 : i32
    %24 = arith.cmpi sge, %arg0, %c0_i32_20 : i32
    %25 = arith.extui %24 : i1 to i32
    %c0_i32_21 = arith.constant 0 : i32
    %26 = arith.cmpi ne, %25, %c0_i32_21 : i32
    scf.if %26 {
      %c128_i32 = arith.constant 128 : i32
      %27 = arith.muli %arg0, %c128_i32 : i32
      %28 = tpu.iota {dimensions = array<i32: 0>} : vector<128x128xi32>
      %29 = vector.broadcast %27 : i32 to vector<128x128xi32>
      %30 = arith.addi %29, %28 : vector<128x128xi32>
      %c8_i32 = arith.constant 8 : i32
      %31 = vector.broadcast %c8_i32 : i32 to vector<128x128xi32>
      %32 = arith.cmpi slt, %30, %31 : vector<128x128xi32>
      %cst_22 = arith.constant 0.000000e+00 : f32
      %33 = vector.broadcast %cst_22 : f32 to vector<128x128xf32>
      %34 = arith.select %32, %11, %33 : vector<128x128xi1>, vector<128x128xf32>
      %c0_23 = arith.constant 0 : index
      %c0_24 = arith.constant 0 : index
      %35 = vector.load %arg8[%c0_23, %c0_24] : memref<128x128xf32, #tpu.memory_space<vmem>>, vector<128x128xf32>
      tpu.vector_store %arg8[%c0_23, %c0_24], %34 {strides = array<i32>} : memref<128x128xf32, #tpu.memory_space<vmem>>, vector<128x128xf32>,
    } else {
    }
    return
  }
  func.func @transform_0(%arg0: i32) -> (i32, i32) {
    %c0_i32 = arith.constant 0 : i32
    %c0_i32_0 = arith.constant 0 : i32
    return %arg0, %c0_i32 : i32, i32
  }
  func.func @transform_1(%arg0: i32) -> (i32, i32) {
    %c0_i32 = arith.constant 0 : i32
    %c0_i32_0 = arith.constant 0 : i32
    %c0_i32_1 = arith.constant 0 : i32
    return %c0_i32, %c0_i32_0 : i32, i32
  }
  func.func @transform_2(%arg0: i32) -> (i32, i32) {
    %c0_i32 = arith.constant 0 : i32
    %c0_i32_0 = arith.constant 0 : i32
    %c0_i32_1 = arith.constant 0 : i32
    return %c0_i32, %c0_i32_0 : i32, i32
  }
  func.func @transform_3(%arg0: i32) -> (i32, i32) {
    %c0_i32 = arith.constant 0 : i32
    %c0_i32_0 = arith.constant 0 : i32
    %c0_i32_1 = arith.constant 0 : i32
    return %c0_i32, %c0_i32_0 : i32, i32
  }
  func.func @transform_4(%arg0: i32) -> (i32, i32) {
    %c0_i32 = arith.constant 0 : i32
    %c0_i32_0 = arith.constant 0 : i32
    %c0_i32_1 = arith.constant 0 : i32
    return %c0_i32, %c0_i32_0 : i32, i32
  }
  func.func @transform_5(%arg0: i32) -> (i32, i32) {
    %c0_i32 = arith.constant 0 : i32
    %c0_i32_0 = arith.constant 0 : i32
    %c0_i32_1 = arith.constant 0 : i32
    return %c0_i32, %c0_i32_0 : i32, i32
  }
  func.func @transform_6(%arg0: i32) -> (i32, i32) {
    %c0_i32 = arith.constant 0 : i32
    %c0_i32_0 = arith.constant 0 : i32
    return %arg0, %c0_i32 : i32, i32
  }
  func.func @transform_7(%arg0: i32) -> (i32, i32) {
    %c0_i32 = arith.constant 0 : i32
    %c0_i32_0 = arith.constant 0 : i32
    return %arg0, %c0_i32 : i32, i32
  }
  func.func @transform_8(%arg0: i32) -> (i32, i32) {
    %c0_i32 = arith.constant 0 : i32
    %c0_i32_0 = arith.constant 0 : i32
    return %arg0, %c0_i32 : i32, i32
  }
}

</mosaic_0001>

<llo_original>
// kernel: tpu_custom_call.1
$region0: #{tpu_custom_call.1}
  #allocation0 [shape = 'u32[]', space=smem, size = 0x4, offset = 0x4, fixed_abs, tag = 'smem constant byte address 0x4 - core index']
  #allocation1 [shape = 'u32[144,128]{1,0:T(1,128)}', space=vmem, size = 0x12000, scoped, tag = 'internal scratch']
  %s0 = inlined_call_operand.hbm [shape: f32[128,128], index: 0, kind: input, shape index: {}]
  %s1 = inlined_call_operand.hbm [shape: f32[128,128], index: 1, kind: input, shape index: {}]
  %s2 = inlined_call_operand.vmem [shape: f32[1,128], index: 2, kind: input, shape index: {}]
  %s3 = inlined_call_operand.hbm [shape: f32[128,128], index: 3, kind: input, shape index: {}]
  %s4 = inlined_call_operand.vmem [shape: f32[1,128], index: 4, kind: input, shape index: {}]
  %s5 = inlined_call_operand.hbm [shape: f32[128,128], index: 5, kind: input, shape index: {}]
  %s6 = inlined_call_operand.hbm [shape: f32[128,128], index: 6, kind: output, shape index: {0}]
  %s7 = inlined_call_operand.hbm [shape: f32[128,128], index: 7, kind: output, shape index: {1}]
  %s8 = inlined_call_operand.hbm [shape: f32[128,256], index: 8, kind: output, shape index: {2}]
  %9 = xla_tuple %s6, %s7, %s8
  %s10 = sld [smem:[#allocation0]]
  $region74: #{tpu_custom_call.1} parent=0
    _
  %s12 = ssub.s32 1, %s10
  %s13 = scalar_select 0, %s12, %s10
  $region1: #{tpu_custom_call.1} parent=0
    #allocation2 [shape = 'u8[65536]{0}', space=vmem, size = 0x10000, scoped, tag = 'input window, operand 0, single buffered']
    #allocation3 [shape = 's32[1]{0}', space=sflag, size = 0x4, scoped, tag = 'scoped memory for tpu_custom_call.1']
    #allocation4 [shape = 's32[1]{0}', space=sflag, size = 0x4, scoped, tag = 'scoped memory for tpu_custom_call.1']
    #allocation5 [shape = 'u8[65536]{0}', space=vmem, size = 0x10000, scoped, tag = 'input window, operand 1, single buffered']
    #allocation6 [shape = 's32[1]{0}', space=sflag, size = 0x4, scoped, tag = 'scoped memory for tpu_custom_call.1']
    #allocation7 [shape = 'u8[65536]{0}', space=vmem, size = 0x10000, scoped, tag = 'input window, operand 3, single buffered']
    #allocation8 [shape = 'u8[65536]{0}', space=vmem, size = 0x10000, scoped, tag = 'input window, operand 5, single buffered']
    #allocation9 [shape = 's32[1]{0}', space=sflag, size = 0x4, scoped, tag = 'scoped memory for tpu_custom_call.1']
    #allocation10 [shape = 'u8[65536]{0}', space=vmem, size = 0x10000, scoped, tag = 'output window, operand 0, single buffered']
    #allocation11 [shape = 'u8[65536]{0}', space=vmem, size = 0x10000, scoped, tag = 'output window, operand 1, single buffered']
    #allocation12 [shape = 's32[1]{0}', space=sflag, size = 0x4, scoped, tag = 'scoped memory for tpu_custom_call.1']
    #allocation13 [shape = 'u8[131072]{0}', space=vmem, size = 0x20000, scoped, tag = 'output window, operand 2, single buffered']
    %14 = vsyncpa [#allocation3], 0
    %15 = vsyncpa [#allocation6], 0
    %16 = vsyncpa [#allocation9], 0
    %17 = vsyncpa [#allocation4], 0
    %18 = vsyncpa [#allocation12], 0
    // Predicated region
    $region2: #{tpu_custom_call.1} parent=1 // pred_check
      _
    $region3: #{tpu_custom_call.1} parent=1 // pred_check_branch
      %20 = sbr.rel (0) target = $region5
    $region4: #{tpu_custom_call.1} parent=1 // pred_region
      %s22 = ssub.s32 2048, 2048
      %23 = vsyncadd [#allocation3], %s22
      %s24 = sshll.u32 [#allocation2], 4
      %s25 = int_to_ptr.vmem [resolvable:$true] %s24
      %30 = dma.hbm_to_vmem [thread:$0]  %s0, 2048, %s25, [#allocation3], 128, 128, 8
    $region5: #{tpu_custom_call.1} parent=1 // pred_fallthru
      _
    // Predicated region
    $region6: #{tpu_custom_call.1} parent=1 // pred_check
      _
    $region7: #{tpu_custom_call.1} parent=1 // pred_check_branch
      %32 = sbr.rel (0) target = $region9
    $region8: #{tpu_custom_call.1} parent=1 // pred_region
      %s34 = ssub.s32 2048, 2048
      %35 = vsyncadd [#allocation6], %s34
      %s36 = sshll.u32 [#allocation5], 4
      %s37 = int_to_ptr.vmem [resolvable:$true] %s36
      %42 = dma.hbm_to_vmem [thread:$0]  %s1, 2048, %s37, [#allocation6], 128, 128, 8
    $region9: #{tpu_custom_call.1} parent=1 // pred_fallthru
      _
    // Predicated region
    $region10: #{tpu_custom_call.1} parent=1 // pred_check
      _
    $region11: #{tpu_custom_call.1} parent=1 // pred_check_branch
      %44 = sbr.rel (0) target = $region13
    $region12: #{tpu_custom_call.1} parent=1 // pred_region
      _
    $region13: #{tpu_custom_call.1} parent=1 // pred_fallthru
      _
    // Predicated region
    $region14: #{tpu_custom_call.1} parent=1 // pred_check
      _
    $region15: #{tpu_custom_call.1} parent=1 // pred_check_branch
      %46 = sbr.rel (0) target = $region17
    $region16: #{tpu_custom_call.1} parent=1 // pred_region
      %s48 = ssub.s32 2048, 2048
      %49 = vsyncadd [#allocation6], %s48
      %s50 = sshll.u32 [#allocation7], 4
      %s51 = int_to_ptr.vmem [resolvable:$true] %s50
      %56 = dma.hbm_to_vmem [thread:$0]  %s3, 2048, %s51, [#allocation6], 128, 128, 8
    $region17: #{tpu_custom_call.1} parent=1 // pred_fallthru
      _
    // Predicated region
    $region18: #{tpu_custom_call.1} parent=1 // pred_check
      _
    $region19: #{tpu_custom_call.1} parent=1 // pred_check_branch
      %58 = sbr.rel (0) target = $region21
    $region20: #{tpu_custom_call.1} parent=1 // pred_region
      _
    $region21: #{tpu_custom_call.1} parent=1 // pred_fallthru
      _
    // Predicated region
    $region22: #{tpu_custom_call.1} parent=1 // pred_check
      _
    $region23: #{tpu_custom_call.1} parent=1 // pred_check_branch
      %60 = sbr.rel (0) target = $region25
    $region24: #{tpu_custom_call.1} parent=1 // pred_region
      %s62 = ssub.s32 2048, 2048
      %63 = vsyncadd [#allocation9], %s62
      %s64 = sshll.u32 [#allocation8], 4
      %s65 = int_to_ptr.vmem [resolvable:$true] %s64
      %70 = dma.hbm_to_vmem [thread:$0]  %s5, 2048, %s65, [#allocation9], 128, 128, 8
    $region25: #{tpu_custom_call.1} parent=1 // pred_fallthru
      _
    // Predicated region
    $region26: #{tpu_custom_call.1} parent=1 // pred_check
      _
    $region27: #{tpu_custom_call.1} parent=1 // pred_check_branch
      %72 = sbr.rel (0) target = $region29
    $region28: #{tpu_custom_call.1} parent=1 // pred_region
      %73 = dma.done [#allocation3], 2048
    $region29: #{tpu_custom_call.1} parent=1 // pred_fallthru
      _
    // Predicated region
    $region30: #{tpu_custom_call.1} parent=1 // pred_check
      _
    $region31: #{tpu_custom_call.1} parent=1 // pred_check_branch
      %75 = sbr.rel (0) target = $region33
    $region32: #{tpu_custom_call.1} parent=1 // pred_region
      %76 = dma.done [#allocation6], 2048
    $region33: #{tpu_custom_call.1} parent=1 // pred_fallthru
      _
    // Predicated region
    $region34: #{tpu_custom_call.1} parent=1 // pred_check
      _
    $region35: #{tpu_custom_call.1} parent=1 // pred_check_branch
      %78 = sbr.rel (0) target = $region37
    $region36: #{tpu_custom_call.1} parent=1 // pred_region
      %79 = dma.done [#allocation6], 2048
    $region37: #{tpu_custom_call.1} parent=1 // pred_fallthru
      _
    // Predicated region
    $region38: #{tpu_custom_call.1} parent=1 // pred_check
      _
    $region39: #{tpu_custom_call.1} parent=1 // pred_check_branch
      %81 = sbr.rel (0) target = $region41
    $region40: #{tpu_custom_call.1} parent=1 // pred_region
      %82 = dma.done [#allocation9], 2048
    $region41: #{tpu_custom_call.1} parent=1 // pred_fallthru
      _
    %v83 = vld [vmem:[#allocation2] sm:$0xff]
    %v84 = vld [vmem:[#allocation2 + $0x8] sm:$0xff]
    %v85 = vld [vmem:[#allocation2 + $0x10] sm:$0xff]
    %v86 = vld [vmem:[#allocation2 + $0x18] sm:$0xff]
    %v87 = vld [vmem:[#allocation2 + $0x20] sm:$0xff]
    %v88 = vld [vmem:[#allocation2 + $0x28] sm:$0xff]
    %v89 = vld [vmem:[#allocation2 + $0x30] sm:$0xff]
    %v90 = vld [vmem:[#allocation2 + $0x38] sm:$0xff]
    %v91 = vld [vmem:[#allocation2 + $0x40] sm:$0xff]
    %v92 = vld [vmem:[#allocation2 + $0x48] sm:$0xff]
    %v93 = vld [vmem:[#allocation2 + $0x50] sm:$0xff]
    %v94 = vld [vmem:[#allocation2 + $0x58] sm:$0xff]
    %v95 = vld [vmem:[#allocation2 + $0x60] sm:$0xff]
    %v96 = vld [vmem:[#allocation2 + $0x68] sm:$0xff]
    %v97 = vld [vmem:[#allocation2 + $0x70] sm:$0xff]
    %v98 = vld [vmem:[#allocation2 + $0x78] sm:$0xff]
    %v99 = vld [vmem:[#allocation5] sm:$0xff]
    %v100 = vld [vmem:[#allocation5 + $0x8] sm:$0xff]
    %v101 = vld [vmem:[#allocation5 + $0x10] sm:$0xff]
    %v102 = vld [vmem:[#allocation5 + $0x18] sm:$0xff]
    %v103 = vld [vmem:[#allocation5 + $0x20] sm:$0xff]
    %v104 = vld [vmem:[#allocation5 + $0x28] sm:$0xff]
    %v105 = vld [vmem:[#allocation5 + $0x30] sm:$0xff]
    %v106 = vld [vmem:[#allocation5 + $0x38] sm:$0xff]
    %v107 = vld [vmem:[#allocation5 + $0x40] sm:$0xff]
    %v108 = vld [vmem:[#allocation5 + $0x48] sm:$0xff]
    %v109 = vld [vmem:[#allocation5 + $0x50] sm:$0xff]
    %v110 = vld [vmem:[#allocation5 + $0x58] sm:$0xff]
    %v111 = vld [vmem:[#allocation5 + $0x60] sm:$0xff]
    %v112 = vld [vmem:[#allocation5 + $0x68] sm:$0xff]
    %v113 = vld [vmem:[#allocation5 + $0x70] sm:$0xff]
    %v114 = vld [vmem:[#allocation5 + $0x78] sm:$0xff]
    %v115 = vld [vmem:[%s2] sm:$0x1]
    %v117 = vlaneseq
    %v118 = vshrl.u32 %v117, 7
    %v119 = vsub.s32 0, %v118
    %v120 = vrot.slane %v115, %v119
    %122 = vmatprep.subr.mxu0 0.0
    %123 = vmatpush1.msra.mxu0 %v114
    %124 = vmatprep.subr.mxu0 0.0
    %125 = vmatpush1.msra.mxu0 %v113
    %126 = vmatprep.subr.mxu0 0.0
    %127 = vmatpush1.msra.mxu0 %v112
    %128 = vmatprep.subr.mxu0 0.0
    %129 = vmatpush1.msra.mxu0 %v111
    %130 = vmatprep.subr.mxu0 0.0
    %131 = vmatpush1.msra.mxu0 %v110
    %132 = vmatprep.subr.mxu0 0.0
    %133 = vmatpush1.msra.mxu0 %v109
    %134 = vmatprep.subr.mxu0 0.0
    %135 = vmatpush1.msra.mxu0 %v108
    %136 = vmatprep.subr.mxu0 0.0
    %137 = vmatpush1.msra.mxu0 %v107
    %138 = vmatprep.subr.mxu0 0.0
    %139 = vmatpush1.msra.mxu0 %v106
    %140 = vmatprep.subr.mxu0 0.0
    %141 = vmatpush1.msra.mxu0 %v105
    %142 = vmatprep.subr.mxu0 0.0
    %143 = vmatpush1.msra.mxu0 %v104
    %144 = vmatprep.subr.mxu0 0.0
    %145 = vmatpush1.msra.mxu0 %v103
    %146 = vmatprep.subr.mxu0 0.0
    %147 = vmatpush1.msra.mxu0 %v102
    %148 = vmatprep.subr.mxu0 0.0
    %149 = vmatpush1.msra.mxu0 %v101
    %150 = vmatprep.subr.mxu0 0.0
    %151 = vmatpush1.msra.mxu0 %v100
    %152 = vmatprep.subr.mxu0 0.0
    %153 = vmatpush1.msra.mxu0 %v99
    %154 = vmatprep.subr.mxu0 0.0
    %155 = vmatpush2.msra.mxu0 0.0
    %156 = vmatprep.subr.mxu0 0.0
    %157 = vmatpush2.msra.mxu0 0.0
    %158 = vmatprep.subr.mxu0 0.0
    %159 = vmatpush2.msra.mxu0 0.0
    %160 = vmatprep.subr.mxu0 0.0
    %161 = vmatpush2.msra.mxu0 0.0
    %162 = vmatprep.subr.mxu0 0.0
    %163 = vmatpush2.msra.mxu0 0.0
    %164 = vmatprep.subr.mxu0 0.0
    %165 = vmatpush2.msra.mxu0 0.0
    %166 = vmatprep.subr.mxu0 0.0
    %167 = vmatpush2.msra.mxu0 0.0
    %168 = vmatprep.subr.mxu0 0.0
    %169 = vmatpush2.msra.mxu0 0.0
    %170 = vmatprep.subr.mxu0 0.0
    %171 = vmatpush2.msra.mxu0 0.0
    %172 = vmatprep.subr.mxu0 0.0
    %173 = vmatpush2.msra.mxu0 0.0
    %174 = vmatprep.subr.mxu0 0.0
    %175 = vmatpush2.msra.mxu0 0.0
    %176 = vmatprep.subr.mxu0 0.0
    %177 = vmatpush2.msra.mxu0 0.0
    %178 = vmatprep.subr.mxu0 0.0
    %179 = vmatpush2.msra.mxu0 0.0
    %180 = vmatprep.subr.mxu0 0.0
    %181 = vmatpush2.msra.mxu0 0.0
    %182 = vmatprep.subr.mxu0 0.0
    %183 = vmatpush2.msra.mxu0 0.0
    %184 = vmatprep.subr.mxu0 0.0
    %185 = vmatpush2.msra.mxu0 0.0
    %186 = vmatprep.mubr.f32.mxu0 0.0
    %187 = vmatmul.mubr.f32.gmra.mxu0 %v83
    %v188 = vpop.f32.mrf.mxu0
    %v189 = vadd.f32 %v120, %v188
    %v190 = vpop.f32.mrf.mxu0
    %191 = vmatprep.mubr.f32.mxu0 0.0
    %192 = vmatmul.mubr.f32.gmra.mxu0 %v84
    %v193 = vpop.f32.mrf.mxu0
    %v194 = vadd.f32 %v120, %v193
    %v195 = vpop.f32.mrf.mxu0
    %196 = vmatprep.mubr.f32.mxu0 0.0
    %197 = vmatmul.mubr.f32.gmra.mxu0 %v85
    %v198 = vpop.f32.mrf.mxu0
    %v199 = vadd.f32 %v120, %v198
    %v200 = vpop.f32.mrf.mxu0
    %201 = vmatprep.mubr.f32.mxu0 0.0
    %202 = vmatmul.mubr.f32.gmra.mxu0 %v86
    %v203 = vpop.f32.mrf.mxu0
    %v204 = vadd.f32 %v120, %v203
    %v205 = vpop.f32.mrf.mxu0
    %206 = vmatprep.mubr.f32.mxu0 0.0
    %207 = vmatmul.mubr.f32.gmra.mxu0 %v87
    %v208 = vpop.f32.mrf.mxu0
    %v209 = vadd.f32 %v120, %v208
    %v210 = vpop.f32.mrf.mxu0
    %211 = vmatprep.mubr.f32.mxu0 0.0
    %212 = vmatmul.mubr.f32.gmra.mxu0 %v88
    %v213 = vpop.f32.mrf.mxu0
    %v214 = vadd.f32 %v120, %v213
    %v215 = vpop.f32.mrf.mxu0
    %216 = vmatprep.mubr.f32.mxu0 0.0
    %217 = vmatmul.mubr.f32.gmra.mxu0 %v89
    %v218 = vpop.f32.mrf.mxu0
    %v219 = vadd.f32 %v120, %v218
    %v220 = vpop.f32.mrf.mxu0
    %221 = vmatprep.mubr.f32.mxu0 0.0
    %222 = vmatmul.mubr.f32.gmra.mxu0 %v90
    %v223 = vpop.f32.mrf.mxu0
    %v224 = vadd.f32 %v120, %v223
    %v225 = vpop.f32.mrf.mxu0
    %226 = vmatprep.mubr.f32.mxu0 0.0
    %227 = vmatmul.mubr.f32.gmra.mxu0 %v91
    %v228 = vpop.f32.mrf.mxu0
    %v229 = vadd.f32 %v120, %v228
    %v230 = vpop.f32.mrf.mxu0
    %231 = vmatprep.mubr.f32.mxu0 0.0
    %232 = vmatmul.mubr.f32.gmra.mxu0 %v92
    %v233 = vpop.f32.mrf.mxu0
    %v234 = vadd.f32 %v120, %v233
    %v235 = vpop.f32.mrf.mxu0
    %236 = vmatprep.mubr.f32.mxu0 0.0
    %237 = vmatmul.mubr.f32.gmra.mxu0 %v93
    %v238 = vpop.f32.mrf.mxu0
    %v239 = vadd.f32 %v120, %v238
    %v240 = vpop.f32.mrf.mxu0
    %241 = vmatprep.mubr.f32.mxu0 0.0
    %242 = vmatmul.mubr.f32.gmra.mxu0 %v94
    %v243 = vpop.f32.mrf.mxu0
    %v244 = vadd.f32 %v120, %v243
    %v245 = vpop.f32.mrf.mxu0
    %246 = vmatprep.mubr.f32.mxu0 0.0
    %247 = vmatmul.mubr.f32.gmra.mxu0 %v95
    %v248 = vpop.f32.mrf.mxu0
    %v249 = vadd.f32 %v120, %v248
    %v250 = vpop.f32.mrf.mxu0
    %251 = vmatprep.mubr.f32.mxu0 0.0
    %252 = vmatmul.mubr.f32.gmra.mxu0 %v96
    %v253 = vpop.f32.mrf.mxu0
    %v254 = vadd.f32 %v120, %v253
    %v255 = vpop.f32.mrf.mxu0
    %256 = vmatprep.mubr.f32.mxu0 0.0
    %257 = vmatmul.mubr.f32.gmra.mxu0 %v97
    %v258 = vpop.f32.mrf.mxu0
    %v259 = vadd.f32 %v120, %v258
    %v260 = vpop.f32.mrf.mxu0
    %261 = vmatprep.mubr.f32.mxu0 0.0
    %262 = vmatmul.mubr.f32.gmra.mxu0 %v98
    %v263 = vpop.f32.mrf.mxu0
    %v264 = vadd.f32 %v120, %v263
    %v265 = vpop.f32.mrf.mxu0
    %266 = vdwg.mxu0
    %267 = vst [vmem:[#allocation10] sm:$0xff] %v189
    %268 = vst [vmem:[#allocation10 + $0x8] sm:$0xff] %v194
    %269 = vst [vmem:[#allocation10 + $0x10] sm:$0xff] %v199
    %270 = vst [vmem:[#allocation10 + $0x18] sm:$0xff] %v204
    %271 = vst [vmem:[#allocation10 + $0x20] sm:$0xff] %v209
    %272 = vst [vmem:[#allocation10 + $0x28] sm:$0xff] %v214
    %273 = vst [vmem:[#allocation10 + $0x30] sm:$0xff] %v219
    %274 = vst [vmem:[#allocation10 + $0x38] sm:$0xff] %v224
    %275 = vst [vmem:[#allocation10 + $0x40] sm:$0xff] %v229
    %276 = vst [vmem:[#allocation10 + $0x48] sm:$0xff] %v234
    %277 = vst [vmem:[#allocation10 + $0x50] sm:$0xff] %v239
    %278 = vst [vmem:[#allocation10 + $0x58] sm:$0xff] %v244
    %279 = vst [vmem:[#allocation10 + $0x60] sm:$0xff] %v249
    %280 = vst [vmem:[#allocation10 + $0x68] sm:$0xff] %v254
    %281 = vst [vmem:[#allocation10 + $0x70] sm:$0xff] %v259
    %282 = vst [vmem:[#allocation10 + $0x78] sm:$0xff] %v264
    %v283 = vld [vmem:[#allocation7] sm:$0xff]
    %v284 = vld [vmem:[#allocation7 + $0x8] sm:$0xff]
    %v285 = vld [vmem:[#allocation7 + $0x10] sm:$0xff]
    %v286 = vld [vmem:[#allocation7 + $0x18] sm:$0xff]
    %v287 = vld [vmem:[#allocation7 + $0x20] sm:$0xff]
    %v288 = vld [vmem:[#allocation7 + $0x28] sm:$0xff]
    %v289 = vld [vmem:[#allocation7 + $0x30] sm:$0xff]
    %v290 = vld [vmem:[#allocation7 + $0x38] sm:$0xff]
    %v291 = vld [vmem:[#allocation7 + $0x40] sm:$0xff]
    %v292 = vld [vmem:[#allocation7 + $0x48] sm:$0xff]
    %v293 = vld [vmem:[#allocation7 + $0x50] sm:$0xff]
    %v294 = vld [vmem:[#allocation7 + $0x58] sm:$0xff]
    %v295 = vld [vmem:[#allocation7 + $0x60] sm:$0xff]
    %v296 = vld [vmem:[#allocation7 + $0x68] sm:$0xff]
    %v297 = vld [vmem:[#allocation7 + $0x70] sm:$0xff]
    %v298 = vld [vmem:[#allocation7 + $0x78] sm:$0xff]
    %v299 = vld [vmem:[%s4] sm:$0x1]
    %v301 = vlaneseq
    %v302 = vshrl.u32 %v301, 7
    %v303 = vsub.s32 0, %v302
    %v304 = vrot.slane %v299, %v303
    %306 = vmatprep.subr.mxu0 0.0
    %307 = vmatpush1.msra.mxu0 %v298
    %308 = vmatprep.subr.mxu0 0.0
    %309 = vmatpush1.msra.mxu0 %v297
    %310 = vmatprep.subr.mxu0 0.0
    %311 = vmatpush1.msra.mxu0 %v296
    %312 = vmatprep.subr.mxu0 0.0
    %313 = vmatpush1.msra.mxu0 %v295
    %314 = vmatprep.subr.mxu0 0.0
    %315 = vmatpush1.msra.mxu0 %v294
    %316 = vmatprep.subr.mxu0 0.0
    %317 = vmatpush1.msra.mxu0 %v293
    %318 = vmatprep.subr.mxu0 0.0
    %319 = vmatpush1.msra.mxu0 %v292
    %320 = vmatprep.subr.mxu0 0.0
    %321 = vmatpush1.msra.mxu0 %v291
    %322 = vmatprep.subr.mxu0 0.0
    %323 = vmatpush1.msra.mxu0 %v290
    %324 = vmatprep.subr.mxu0 0.0
    %325 = vmatpush1.msra.mxu0 %v289
    %326 = vmatprep.subr.mxu0 0.0
    %327 = vmatpush1.msra.mxu0 %v288
    %328 = vmatprep.subr.mxu0 0.0
    %329 = vmatpush1.msra.mxu0 %v287
    %330 = vmatprep.subr.mxu0 0.0
    %331 = vmatpush1.msra.mxu0 %v286
    %332 = vmatprep.subr.mxu0 0.0
    %333 = vmatpush1.msra.mxu0 %v285
    %334 = vmatprep.subr.mxu0 0.0
    %335 = vmatpush1.msra.mxu0 %v284
    %336 = vmatprep.subr.mxu0 0.0
    %337 = vmatpush1.msra.mxu0 %v283
    %338 = vmatprep.subr.mxu0 0.0
    %339 = vmatpush2.msra.mxu0 0.0
    %340 = vmatprep.subr.mxu0 0.0
    %341 = vmatpush2.msra.mxu0 0.0
    %342 = vmatprep.subr.mxu0 0.0
    %343 = vmatpush2.msra.mxu0 0.0
    %344 = vmatprep.subr.mxu0 0.0
    %345 = vmatpush2.msra.mxu0 0.0
    %346 = vmatprep.subr.mxu0 0.0
    %347 = vmatpush2.msra.mxu0 0.0
    %348 = vmatprep.subr.mxu0 0.0
    %349 = vmatpush2.msra.mxu0 0.0
    %350 = vmatprep.subr.mxu0 0.0
    %351 = vmatpush2.msra.mxu0 0.0
    %352 = vmatprep.subr.mxu0 0.0
    %353 = vmatpush2.msra.mxu0 0.0
    %354 = vmatprep.subr.mxu0 0.0
    %355 = vmatpush2.msra.mxu0 0.0
    %356 = vmatprep.subr.mxu0 0.0
    %357 = vmatpush2.msra.mxu0 0.0
    %358 = vmatprep.subr.mxu0 0.0
    %359 = vmatpush2.msra.mxu0 0.0
    %360 = vmatprep.subr.mxu0 0.0
    %361 = vmatpush2.msra.mxu0 0.0
    %362 = vmatprep.subr.mxu0 0.0
    %363 = vmatpush2.msra.mxu0 0.0
    %364 = vmatprep.subr.mxu0 0.0
    %365 = vmatpush2.msra.mxu0 0.0
    %366 = vmatprep.subr.mxu0 0.0
    %367 = vmatpush2.msra.mxu0 0.0
    %368 = vmatprep.subr.mxu0 0.0
    %369 = vmatpush2.msra.mxu0 0.0
    %370 = vmatprep.mubr.f32.mxu0 0.0
    %371 = vmatmul.mubr.f32.gmra.mxu0 %v83
    %v372 = vpop.f32.mrf.mxu0
    %v373 = vadd.f32 %v304, %v372
    %v374 = vpop.f32.mrf.mxu0
    %375 = vmatprep.mubr.f32.mxu0 0.0
    %376 = vmatmul.mubr.f32.gmra.mxu0 %v84
    %v377 = vpop.f32.mrf.mxu0
    %v378 = vadd.f32 %v304, %v377
    %v379 = vpop.f32.mrf.mxu0
    %380 = vmatprep.mubr.f32.mxu0 0.0
    %381 = vmatmul.mubr.f32.gmra.mxu0 %v85
    %v382 = vpop.f32.mrf.mxu0
    %v383 = vadd.f32 %v304, %v382
    %v384 = vpop.f32.mrf.mxu0
    %385 = vmatprep.mubr.f32.mxu0 0.0
    %386 = vmatmul.mubr.f32.gmra.mxu0 %v86
    %v387 = vpop.f32.mrf.mxu0
    %v388 = vadd.f32 %v304, %v387
    %v389 = vpop.f32.mrf.mxu0
    %390 = vmatprep.mubr.f32.mxu0 0.0
    %391 = vmatmul.mubr.f32.gmra.mxu0 %v87
    %v392 = vpop.f32.mrf.mxu0
    %v393 = vadd.f32 %v304, %v392
    %v394 = vpop.f32.mrf.mxu0
    %395 = vmatprep.mubr.f32.mxu0 0.0
    %396 = vmatmul.mubr.f32.gmra.mxu0 %v88
    %v397 = vpop.f32.mrf.mxu0
    %v398 = vadd.f32 %v304, %v397
    %v399 = vpop.f32.mrf.mxu0
    %400 = vmatprep.mubr.f32.mxu0 0.0
    %401 = vmatmul.mubr.f32.gmra.mxu0 %v89
    %v402 = vpop.f32.mrf.mxu0
    %v403 = vadd.f32 %v304, %v402
    %v404 = vpop.f32.mrf.mxu0
    %405 = vmatprep.mubr.f32.mxu0 0.0
    %406 = vmatmul.mubr.f32.gmra.mxu0 %v90
    %v407 = vpop.f32.mrf.mxu0
    %v408 = vadd.f32 %v304, %v407
    %v409 = vpop.f32.mrf.mxu0
    %410 = vmatprep.mubr.f32.mxu0 0.0
    %411 = vmatmul.mubr.f32.gmra.mxu0 %v91
    %v412 = vpop.f32.mrf.mxu0
    %v413 = vadd.f32 %v304, %v412
    %v414 = vpop.f32.mrf.mxu0
    %415 = vmatprep.mubr.f32.mxu0 0.0
    %416 = vmatmul.mubr.f32.gmra.mxu0 %v92
    %v417 = vpop.f32.mrf.mxu0
    %v418 = vadd.f32 %v304, %v417
    %v419 = vpop.f32.mrf.mxu0
    %420 = vmatprep.mubr.f32.mxu0 0.0
    %421 = vmatmul.mubr.f32.gmra.mxu0 %v93
    %v422 = vpop.f32.mrf.mxu0
    %v423 = vadd.f32 %v304, %v422
    %v424 = vpop.f32.mrf.mxu0
    %425 = vmatprep.mubr.f32.mxu0 0.0
    %426 = vmatmul.mubr.f32.gmra.mxu0 %v94
    %v427 = vpop.f32.mrf.mxu0
    %v428 = vadd.f32 %v304, %v427
    %v429 = vpop.f32.mrf.mxu0
    %430 = vmatprep.mubr.f32.mxu0 0.0
    %431 = vmatmul.mubr.f32.gmra.mxu0 %v95
    %v432 = vpop.f32.mrf.mxu0
    %v433 = vadd.f32 %v304, %v432
    %v434 = vpop.f32.mrf.mxu0
    %435 = vmatprep.mubr.f32.mxu0 0.0
    %436 = vmatmul.mubr.f32.gmra.mxu0 %v96
    %v437 = vpop.f32.mrf.mxu0
    %v438 = vadd.f32 %v304, %v437
    %v439 = vpop.f32.mrf.mxu0
    %440 = vmatprep.mubr.f32.mxu0 0.0
    %441 = vmatmul.mubr.f32.gmra.mxu0 %v97
    %v442 = vpop.f32.mrf.mxu0
    %v443 = vadd.f32 %v304, %v442
    %v444 = vpop.f32.mrf.mxu0
    %445 = vmatprep.mubr.f32.mxu0 0.0
    %446 = vmatmul.mubr.f32.gmra.mxu0 %v98
    %v447 = vpop.f32.mrf.mxu0
    %v448 = vadd.f32 %v304, %v447
    %v449 = vpop.f32.mrf.mxu0
    %450 = vdwg.mxu0
    %v451 = vld [vmem:[#allocation8] sm:$0xff]
    %v452 = vld [vmem:[#allocation8 + $0x8] sm:$0xff]
    %v453 = vld [vmem:[#allocation8 + $0x10] sm:$0xff]
    %v454 = vld [vmem:[#allocation8 + $0x18] sm:$0xff]
    %v455 = vld [vmem:[#allocation8 + $0x20] sm:$0xff]
    %v456 = vld [vmem:[#allocation8 + $0x28] sm:$0xff]
    %v457 = vld [vmem:[#allocation8 + $0x30] sm:$0xff]
    %v458 = vld [vmem:[#allocation8 + $0x38] sm:$0xff]
    %v459 = vld [vmem:[#allocation8 + $0x40] sm:$0xff]
    %v460 = vld [vmem:[#allocation8 + $0x48] sm:$0xff]
    %v461 = vld [vmem:[#allocation8 + $0x50] sm:$0xff]
    %v462 = vld [vmem:[#allocation8 + $0x58] sm:$0xff]
    %v463 = vld [vmem:[#allocation8 + $0x60] sm:$0xff]
    %v464 = vld [vmem:[#allocation8 + $0x68] sm:$0xff]
    %v465 = vld [vmem:[#allocation8 + $0x70] sm:$0xff]
    %v466 = vld [vmem:[#allocation8 + $0x78] sm:$0xff]
    %467 = vmatprep.subr.mxu0 0.0
    %468 = vmatpush1.msra.mxu0 %v466
    %469 = vmatprep.subr.mxu0 0.0
    %470 = vmatpush1.msra.mxu0 %v465
    %471 = vmatprep.subr.mxu0 0.0
    %472 = vmatpush1.msra.mxu0 %v464
    %473 = vmatprep.subr.mxu0 0.0
    %474 = vmatpush1.msra.mxu0 %v463
    %475 = vmatprep.subr.mxu0 0.0
    %476 = vmatpush1.msra.mxu0 %v462
    %477 = vmatprep.subr.mxu0 0.0
    %478 = vmatpush1.msra.mxu0 %v461
    %479 = vmatprep.subr.mxu0 0.0
    %480 = vmatpush1.msra.mxu0 %v460
    %481 = vmatprep.subr.mxu0 0.0
    %482 = vmatpush1.msra.mxu0 %v459
    %483 = vmatprep.subr.mxu0 0.0
    %484 = vmatpush1.msra.mxu0 %v458
    %485 = vmatprep.subr.mxu0 0.0
    %486 = vmatpush1.msra.mxu0 %v457
    %487 = vmatprep.subr.mxu0 0.0
    %488 = vmatpush1.msra.mxu0 %v456
    %489 = vmatprep.subr.mxu0 0.0
    %490 = vmatpush1.msra.mxu0 %v455
    %491 = vmatprep.subr.mxu0 0.0
    %492 = vmatpush1.msra.mxu0 %v454
    %493 = vmatprep.subr.mxu0 0.0
    %494 = vmatpush1.msra.mxu0 %v453
    %495 = vmatprep.subr.mxu0 0.0
    %496 = vmatpush1.msra.mxu0 %v452
    %497 = vmatprep.subr.mxu0 0.0
    %498 = vmatpush1.msra.mxu0 %v451
    %499 = vmatprep.subr.mxu0 0.0
    %500 = vmatpush2.msra.mxu0 0.0
    %501 = vmatprep.subr.mxu0 0.0
    %502 = vmatpush2.msra.mxu0 0.0
    %503 = vmatprep.subr.mxu0 0.0
    %504 = vmatpush2.msra.mxu0 0.0
    %505 = vmatprep.subr.mxu0 0.0
    %506 = vmatpush2.msra.mxu0 0.0
    %507 = vmatprep.subr.mxu0 0.0
    %508 = vmatpush2.msra.mxu0 0.0
    %509 = vmatprep.subr.mxu0 0.0
    %510 = vmatpush2.msra.mxu0 0.0
    %511 = vmatprep.subr.mxu0 0.0
    %512 = vmatpush2.msra.mxu0 0.0
    %513 = vmatprep.subr.mxu0 0.0
    %514 = vmatpush2.msra.mxu0 0.0
    %515 = vmatprep.subr.mxu0 0.0
    %516 = vmatpush2.msra.mxu0 0.0
    %517 = vmatprep.subr.mxu0 0.0
    %518 = vmatpush2.msra.mxu0 0.0
    %519 = vmatprep.subr.mxu0 0.0
    %520 = vmatpush2.msra.mxu0 0.0
    %521 = vmatprep.subr.mxu0 0.0
    %522 = vmatpush2.msra.mxu0 0.0
    %523 = vmatprep.subr.mxu0 0.0
    %524 = vmatpush2.msra.mxu0 0.0
    %525 = vmatprep.subr.mxu0 0.0
    %526 = vmatpush2.msra.mxu0 0.0
    %527 = vmatprep.subr.mxu0 0.0
    %528 = vmatpush2.msra.mxu0 0.0
    %529 = vmatprep.subr.mxu0 0.0
    %530 = vmatpush2.msra.mxu0 0.0
    %531 = vmatprep.mubr.f32.mxu0 0.0
    %532 = vmatmul.mubr.f32.gmra.mxu0 %v83
    %v533 = vpop.f32.mrf.mxu0
    %v534 = vadd.f32 0.0, %v533
    %v535 = vpop.f32.mrf.mxu0
    %536 = vmatprep.mubr.f32.mxu0 0.0
    %537 = vmatmul.mubr.f32.gmra.mxu0 %v84
    %v538 = vpop.f32.mrf.mxu0
    %v539 = vadd.f32 0.0, %v538
    %v540 = vpop.f32.mrf.mxu0
    %541 = vmatprep.mubr.f32.mxu0 0.0
    %542 = vmatmul.mubr.f32.gmra.mxu0 %v85
    %v543 = vpop.f32.mrf.mxu0
    %v544 = vadd.f32 0.0, %v543
    %v545 = vpop.f32.mrf.mxu0
    %546 = vmatprep.mubr.f32.mxu0 0.0
    %547 = vmatmul.mubr.f32.gmra.mxu0 %v86
    %v548 = vpop.f32.mrf.mxu0
    %v549 = vadd.f32 0.0, %v548
    %v550 = vpop.f32.mrf.mxu0
    %551 = vmatprep.mubr.f32.mxu0 0.0
    %552 = vmatmul.mubr.f32.gmra.mxu0 %v87
    %v553 = vpop.f32.mrf.mxu0
    %v554 = vadd.f32 0.0, %v553
    %v555 = vpop.f32.mrf.mxu0
    %556 = vmatprep.mubr.f32.mxu0 0.0
    %557 = vmatmul.mubr.f32.gmra.mxu0 %v88
    %v558 = vpop.f32.mrf.mxu0
    %v559 = vadd.f32 0.0, %v558
    %v560 = vpop.f32.mrf.mxu0
    %561 = vmatprep.mubr.f32.mxu0 0.0
    %562 = vmatmul.mubr.f32.gmra.mxu0 %v89
    %v563 = vpop.f32.mrf.mxu0
    %v564 = vadd.f32 0.0, %v563
    %v565 = vpop.f32.mrf.mxu0
    %566 = vmatprep.mubr.f32.mxu0 0.0
    %567 = vmatmul.mubr.f32.gmra.mxu0 %v90
    %v568 = vpop.f32.mrf.mxu0
    %v569 = vadd.f32 0.0, %v568
    %v570 = vpop.f32.mrf.mxu0
    %571 = vmatprep.mubr.f32.mxu0 0.0
    %572 = vmatmul.mubr.f32.gmra.mxu0 %v91
    %v573 = vpop.f32.mrf.mxu0
    %v574 = vadd.f32 0.0, %v573
    %v575 = vpop.f32.mrf.mxu0
    %576 = vmatprep.mubr.f32.mxu0 0.0
    %577 = vmatmul.mubr.f32.gmra.mxu0 %v92
    %v578 = vpop.f32.mrf.mxu0
    %v579 = vadd.f32 0.0, %v578
    %v580 = vpop.f32.mrf.mxu0
    %581 = vmatprep.mubr.f32.mxu0 0.0
    %582 = vmatmul.mubr.f32.gmra.mxu0 %v93
    %v583 = vpop.f32.mrf.mxu0
    %v584 = vadd.f32 0.0, %v583
    %v585 = vpop.f32.mrf.mxu0
    %586 = vmatprep.mubr.f32.mxu0 0.0
    %587 = vmatmul.mubr.f32.gmra.mxu0 %v94
    %v588 = vpop.f32.mrf.mxu0
    %v589 = vadd.f32 0.0, %v588
    %v590 = vpop.f32.mrf.mxu0
    %591 = vmatprep.mubr.f32.mxu0 0.0
    %592 = vmatmul.mubr.f32.gmra.mxu0 %v95
    %v593 = vpop.f32.mrf.mxu0
    %v594 = vadd.f32 0.0, %v593
    %v595 = vpop.f32.mrf.mxu0
    %596 = vmatprep.mubr.f32.mxu0 0.0
    %597 = vmatmul.mubr.f32.gmra.mxu0 %v96
    %v598 = vpop.f32.mrf.mxu0
    %v599 = vadd.f32 0.0, %v598
    %v600 = vpop.f32.mrf.mxu0
    %601 = vmatprep.mubr.f32.mxu0 0.0
    %602 = vmatmul.mubr.f32.gmra.mxu0 %v97
    %v603 = vpop.f32.mrf.mxu0
    %v604 = vadd.f32 0.0, %v603
    %v605 = vpop.f32.mrf.mxu0
    %606 = vmatprep.mubr.f32.mxu0 0.0
    %607 = vmatmul.mubr.f32.gmra.mxu0 %v98
    %v608 = vpop.f32.mrf.mxu0
    %v609 = vadd.f32 0.0, %v608
    %v610 = vpop.f32.mrf.mxu0
    %611 = vdwg.mxu0
    %612 = vst [vmem:[#allocation13] sm:$0xff] %v534
    %613 = vst [vmem:[#allocation13 + $0x10] sm:$0xff] %v539
    %614 = vst [vmem:[#allocation13 + $0x20] sm:$0xff] %v544
    %615 = vst [vmem:[#allocation13 + $0x30] sm:$0xff] %v549
    %616 = vst [vmem:[#allocation13 + $0x40] sm:$0xff] %v554
    %617 = vst [vmem:[#allocation13 + $0x50] sm:$0xff] %v559
    %618 = vst [vmem:[#allocation13 + $0x60] sm:$0xff] %v564
    %619 = vst [vmem:[#allocation13 + $0x70] sm:$0xff] %v569
    %620 = vst [vmem:[#allocation13 + $0x80] sm:$0xff] %v574
    %621 = vst [vmem:[#allocation13 + $0x90] sm:$0xff] %v579
    %622 = vst [vmem:[#allocation13 + $0xa0] sm:$0xff] %v584
    %623 = vst [vmem:[#allocation13 + $0xb0] sm:$0xff] %v589
    %624 = vst [vmem:[#allocation13 + $0xc0] sm:$0xff] %v594
    %625 = vst [vmem:[#allocation13 + $0xd0] sm:$0xff] %v599
    %626 = vst [vmem:[#allocation13 + $0xe0] sm:$0xff] %v604
    %627 = vst [vmem:[#allocation13 + $0xf0] sm:$0xff] %v609
    %v628 = vlaneseq
    %v629 = vand.u32 %v628, 127
    %vm630 = vcmp.eq.s32.totalorder %v629, 0
    %v631 = vsel %vm630, 1, 0
    %v632 = vcvt.s32.f32 %v631
    %633 = vst [vmem:[#allocation13 + $0x8] sm:$0xff] %v632
    %634 = vst [vmem:[#allocation13 + $0x18] sm:$0xff] %v632
    %635 = vst [vmem:[#allocation13 + $0x28] sm:$0xff] %v632
    %636 = vst [vmem:[#allocation13 + $0x38] sm:$0xff] %v632
    %637 = vst [vmem:[#allocation13 + $0x48] sm:$0xff] %v632
    %638 = vst [vmem:[#allocation13 + $0x58] sm:$0xff] %v632
    %639 = vst [vmem:[#allocation13 + $0x68] sm:$0xff] %v632
    %640 = vst [vmem:[#allocation13 + $0x78] sm:$0xff] %v632
    %641 = vst [vmem:[#allocation13 + $0x88] sm:$0xff] %v632
    %642 = vst [vmem:[#allocation13 + $0x98] sm:$0xff] %v632
    %643 = vst [vmem:[#allocation13 + $0xa8] sm:$0xff] %v632
    %644 = vst [vmem:[#allocation13 + $0xb8] sm:$0xff] %v632
    %645 = vst [vmem:[#allocation13 + $0xc8] sm:$0xff] %v632
    %646 = vst [vmem:[#allocation13 + $0xd8] sm:$0xff] %v632
    %647 = vst [vmem:[#allocation13 + $0xe8] sm:$0xff] %v632
    %648 = vst [vmem:[#allocation13 + $0xf8] sm:$0xff] %v632
    %p649 = scmp.lt.s32.totalorder 0, 0
    // Predicated region
    $region42: #{tpu_custom_call.1} parent=1 // pred_check
      %p650 = pneg %p649
    $region43: #{tpu_custom_call.1} parent=1 // pred_check_branch
      %652 = sbr.rel (%p650) target = $region45
    $region44: #{tpu_custom_call.1} parent=1 // pred_region
      %653 = vst [vmem:[#allocation11] sm:$0xff] %v373
      %654 = vst [vmem:[#allocation11 + $0x8] sm:$0xff] %v378
      %655 = vst [vmem:[#allocation11 + $0x10] sm:$0xff] %v383
      %656 = vst [vmem:[#allocation11 + $0x18] sm:$0xff] %v388
      %657 = vst [vmem:[#allocation11 + $0x20] sm:$0xff] %v393
      %658 = vst [vmem:[#allocation11 + $0x28] sm:$0xff] %v398
      %659 = vst [vmem:[#allocation11 + $0x30] sm:$0xff] %v403
      %660 = vst [vmem:[#allocation11 + $0x38] sm:$0xff] %v408
      %661 = vst [vmem:[#allocation11 + $0x40] sm:$0xff] %v413
      %662 = vst [vmem:[#allocation11 + $0x48] sm:$0xff] %v418
      %663 = vst [vmem:[#allocation11 + $0x50] sm:$0xff] %v423
      %664 = vst [vmem:[#allocation11 + $0x58] sm:$0xff] %v428
      %665 = vst [vmem:[#allocation11 + $0x60] sm:$0xff] %v433
      %666 = vst [vmem:[#allocation11 + $0x68] sm:$0xff] %v438
      %667 = vst [vmem:[#allocation11 + $0x70] sm:$0xff] %v443
      %668 = vst [vmem:[#allocation11 + $0x78] sm:$0xff] %v448
    $region45: #{tpu_custom_call.1} parent=1 // pred_fallthru
      _
    %p669 = scmp.ge.s32.totalorder 0, 0
    // Predicated region
    $region46: #{tpu_custom_call.1} parent=1 // pred_check
      %p670 = pneg %p669
    $region47: #{tpu_custom_call.1} parent=1 // pred_check_branch
      %672 = sbr.rel (%p670) target = $region49
    $region48: #{tpu_custom_call.1} parent=1 // pred_region
      %s673 = smul.u32 0, 128
      %v674 = vlaneseq
      %v675 = vshrl.u32 %v674, 7
      %v676 = vadd.s32 %v675, 8
      %v677 = vadd.s32 %v675, 16
      %v678 = vadd.s32 %v675, 24
      %v679 = vadd.s32 %v675, 32
      %v680 = vadd.s32 %v675, 40
      %v681 = vadd.s32 %v675, 48
      %v682 = vadd.s32 %v675, 56
      %v683 = vadd.s32 %v675, 64
      %v684 = vadd.s32 %v675, 72
      %v685 = vadd.s32 %v675, 80
      %v686 = vadd.s32 %v675, 88
      %v687 = vadd.s32 %v675, 96
      %v688 = vadd.s32 %v675, 104
      %v689 = vadd.s32 %v675, 112
      %v690 = vadd.s32 %v675, 120
      %v691 = vstv %s673
      %v692 = vadd.s32 %v691, %v675
      %v693 = vadd.s32 %v691, %v676
      %v694 = vadd.s32 %v691, %v677
      %v695 = vadd.s32 %v691, %v678
      %v696 = vadd.s32 %v691, %v679
      %v697 = vadd.s32 %v691, %v680
      %v698 = vadd.s32 %v691, %v681
      %v699 = vadd.s32 %v691, %v682
      %v700 = vadd.s32 %v691, %v683
      %v701 = vadd.s32 %v691, %v684
      %v702 = vadd.s32 %v691, %v685
      %v703 = vadd.s32 %v691, %v686
      %v704 = vadd.s32 %v691, %v687
      %v705 = vadd.s32 %v691, %v688
      %v706 = vadd.s32 %v691, %v689
      %v707 = vadd.s32 %v691, %v690
      %vm708 = vcmp.lt.s32.totalorder %v692, 8
      %vm709 = vcmp.lt.s32.totalorder %v693, 8
      %vm710 = vcmp.lt.s32.totalorder %v694, 8
      %vm711 = vcmp.lt.s32.totalorder %v695, 8
      %vm712 = vcmp.lt.s32.totalorder %v696, 8
      %vm713 = vcmp.lt.s32.totalorder %v697, 8
      %vm714 = vcmp.lt.s32.totalorder %v698, 8
      %vm715 = vcmp.lt.s32.totalorder %v699, 8
      %vm716 = vcmp.lt.s32.totalorder %v700, 8
      %vm717 = vcmp.lt.s32.totalorder %v701, 8
      %vm718 = vcmp.lt.s32.totalorder %v702, 8
      %vm719 = vcmp.lt.s32.totalorder %v703, 8
      %vm720 = vcmp.lt.s32.totalorder %v704, 8
      %vm721 = vcmp.lt.s32.totalorder %v705, 8
      %vm722 = vcmp.lt.s32.totalorder %v706, 8
      %vm723 = vcmp.lt.s32.totalorder %v707, 8
      %v724 = vsel %vm708, %v373, 0.0
      %v725 = vsel %vm709, %v378, 0.0
      %v726 = vsel %vm710, %v383, 0.0
      %v727 = vsel %vm711, %v388, 0.0
      %v728 = vsel %vm712, %v393, 0.0
      %v729 = vsel %vm713, %v398, 0.0
      %v730 = vsel %vm714, %v403, 0.0
      %v731 = vsel %vm715, %v408, 0.0
      %v732 = vsel %vm716, %v413, 0.0
      %v733 = vsel %vm717, %v418, 0.0
      %v734 = vsel %vm718, %v423, 0.0
      %v735 = vsel %vm719, %v428, 0.0
      %v736 = vsel %vm720, %v433, 0.0
      %v737 = vsel %vm721, %v438, 0.0
      %v738 = vsel %vm722, %v443, 0.0
      %v739 = vsel %vm723, %v448, 0.0
      %740 = vst [vmem:[#allocation11] sm:$0xff] %v724
      %741 = vst [vmem:[#allocation11 + $0x8] sm:$0xff] %v725
      %742 = vst [vmem:[#allocation11 + $0x10] sm:$0xff] %v726
      %743 = vst [vmem:[#allocation11 + $0x18] sm:$0xff] %v727
      %744 = vst [vmem:[#allocation11 + $0x20] sm:$0xff] %v728
      %745 = vst [vmem:[#allocation11 + $0x28] sm:$0xff] %v729
      %746 = vst [vmem:[#allocation11 + $0x30] sm:$0xff] %v730
      %747 = vst [vmem:[#allocation11 + $0x38] sm:$0xff] %v731
      %748 = vst [vmem:[#allocation11 + $0x40] sm:$0xff] %v732
      %749 = vst [vmem:[#allocation11 + $0x48] sm:$0xff] %v733
      %750 = vst [vmem:[#allocation11 + $0x50] sm:$0xff] %v734
      %751 = vst [vmem:[#allocation11 + $0x58] sm:$0xff] %v735
      %752 = vst [vmem:[#allocation11 + $0x60] sm:$0xff] %v736
      %753 = vst [vmem:[#allocation11 + $0x68] sm:$0xff] %v737
      %754 = vst [vmem:[#allocation11 + $0x70] sm:$0xff] %v738
      %755 = vst [vmem:[#allocation11 + $0x78] sm:$0xff] %v739
    $region49: #{tpu_custom_call.1} parent=1 // pred_fallthru
      _
    // Predicated region
    $region50: #{tpu_custom_call.1} parent=1 // pred_check
      _
    $region51: #{tpu_custom_call.1} parent=1 // pred_check_branch
      %757 = sbr.rel (0) target = $region53
    $region52: #{tpu_custom_call.1} parent=1 // pred_region
      %s759 = ssub.s32 2048, 2048
      %760 = vsyncadd [#allocation4], %s759
      %s761 = sshll.u32 [#allocation10], 4
      %s762 = int_to_ptr.vmem [resolvable:$true] %s761
      %767 = dma.vmem_to_hbm [thread:$0]  %s762, 2048, %s6, [#allocation4], 128, 128, 8
    $region53: #{tpu_custom_call.1} parent=1 // pred_fallthru
      _
    // Predicated region
    $region54: #{tpu_custom_call.1} parent=1 // pred_check
      _
    $region55: #{tpu_custom_call.1} parent=1 // pred_check_branch
      %769 = sbr.rel (0) target = $region57
    $region56: #{tpu_custom_call.1} parent=1 // pred_region
      %s771 = ssub.s32 2048, 2048
      %772 = vsyncadd [#allocation12], %s771
      %s773 = sshll.u32 [#allocation11], 4
      %s774 = int_to_ptr.vmem [resolvable:$true] %s773
      %779 = dma.vmem_to_hbm [thread:$0]  %s774, 2048, %s7, [#allocation12], 128, 128, 8
    $region57: #{tpu_custom_call.1} parent=1 // pred_fallthru
      _
    // Predicated region
    $region58: #{tpu_custom_call.1} parent=1 // pred_check
      _
    $region59: #{tpu_custom_call.1} parent=1 // pred_check_branch
      %781 = sbr.rel (0) target = $region61
    $region60: #{tpu_custom_call.1} parent=1 // pred_region
      %s783 = ssub.s32 4096, 4096
      %784 = vsyncadd [#allocation12], %s783
      %s785 = sshll.u32 [#allocation13], 4
      %s786 = int_to_ptr.vmem [resolvable:$true] %s785
      %791 = dma.vmem_to_hbm [thread:$0]  %s786, 4096, %s8, [#allocation12], 256, 256, 16
    $region61: #{tpu_custom_call.1} parent=1 // pred_fallthru
      _
    // Predicated region
    $region62: #{tpu_custom_call.1} parent=1 // pred_check
      _
    $region63: #{tpu_custom_call.1} parent=1 // pred_check_branch
      %793 = sbr.rel (0) target = $region65
    $region64: #{tpu_custom_call.1} parent=1 // pred_region
      %794 = dma.done [#allocation4], 2048
    $region65: #{tpu_custom_call.1} parent=1 // pred_fallthru
      _
    // Predicated region
    $region66: #{tpu_custom_call.1} parent=1 // pred_check
      _
    $region67: #{tpu_custom_call.1} parent=1 // pred_check_branch
      %796 = sbr.rel (0) target = $region69
    $region68: #{tpu_custom_call.1} parent=1 // pred_region
      %797 = dma.done [#allocation12], 2048
    $region69: #{tpu_custom_call.1} parent=1 // pred_fallthru
      _
    // Predicated region
    $region70: #{tpu_custom_call.1} parent=1 // pred_check
      _
    $region71: #{tpu_custom_call.1} parent=1 // pred_check_branch
      %799 = sbr.rel (0) target = $region73
    $region72: #{tpu_custom_call.1} parent=1 // pred_region
      %800 = dma.done [#allocation12], 4096
    $region73: #{tpu_custom_call.1} parent=1 // pred_fallthru
      _
    %801 = vsyncpa [#allocation3], 1
    %802 = vsyncpa [#allocation6], 1
    %803 = vsyncpa [#allocation9], 1
    %804 = vsyncpa [#allocation4], 1
    %805 = vsyncpa [#allocation12], 1

</llo_original>
